<compile_context>
chip_gen: v5e
topology: v5e:2x2
jax: 0.10.0
libtpu: 0.0.40
codegen_flags: <defaults>
</compile_context>

<pallas_src>
import functools

import jax
import jax.numpy as jnp
from jax.experimental import pallas as pl
from jax.experimental.pallas import tpu as pltpu

LANE = 128
ROW = 16  # bf16 packs 16 rows per sublane pair; round batch tiles to this


def _round_up(x: int, m: int) -> int:
    return ((x + m - 1) // m) * m


def _encode_and_dists(x_ref, w1_ref, b1_ref, w2_ref, b2_ref, pt_ref, pn2_ref):
    """Shared body: encoder (bf16 MXU, f32 accum) + f32 Gram-trick distances."""
    x = x_ref[...].astype(jnp.bfloat16)                                  # [TB, D]
    h = jnp.dot(x, w1_ref[...], preferred_element_type=jnp.float32)      # [TB, Hp]
    h = jnp.maximum(h + b1_ref[...], 0.0)
    emb = jnp.dot(h.astype(jnp.bfloat16), w2_ref[...],
                  preferred_element_type=jnp.float32) + b2_ref[...]      # [TB, Ep] f32

    # ||e - p||^2 = ||e||^2 + ||p||^2 - 2 e.p, all in f32 (MXU slack is ample,
    # avoids bf16 cancellation for embeddings close to a prototype).
    g = jnp.dot(emb, pt_ref[...], preferred_element_type=jnp.float32)    # [TB, Pc]
    en2 = jnp.sum(emb * emb, axis=-1, keepdims=True)                     # [TB, 1]
    sq = jnp.maximum(en2 + pn2_ref[...] - 2.0 * g, 0.0)                  # clamp cancellation
    return emb, -jnp.sqrt(sq)


def protonet_kernel_packed(x_ref, w1_ref, b1_ref, w2_ref, b2_ref, pt_ref,
                           pn2_ref, out_ref, *, emb_dim):
    # Prototypes were pre-positioned at columns [emb_dim, emb_dim + P), so the
    # packed block is just a column select: emb in [0, emb_dim), dists after.
    emb, dists = _encode_and_dists(x_ref, w1_ref, b1_ref, w2_ref, b2_ref,
                                   pt_ref, pn2_ref)
    col = jax.lax.broadcasted_iota(jnp.int32, dists.shape, 1)
    out_ref[...] = jnp.where(col < emb_dim, emb, dists)


def protonet_kernel_split(x_ref, w1_ref, b1_ref, w2_ref, b2_ref, pt_ref,
                          pn2_ref, emb_ref, dists_ref):
    emb, dists = _encode_and_dists(x_ref, w1_ref, b1_ref, w2_ref, b2_ref,
                                   pt_ref, pn2_ref)
    emb_ref[...] = emb
    dists_ref[...] = dists


@functools.partial(jax.jit, static_argnames=("tile_b",))
def protonet_forward(x_nchw, w1, b1, w2, b2, prototypes, *, tile_b=1024):
    """x_nchw: [B, C, H, W] float32. Returns (embeddings [B,E], dists [B,P])."""
    B = x_nchw.shape[0]
    x_flat = x_nchw.reshape(B, -1)                 # matches torch .view(B, -1)
    d_in = x_flat.shape[1]
    hid, emb_dim = w1.shape[1], w2.shape[1]
    n_protos = prototypes.shape[0]

    h_pad = _round_up(hid, LANE)
    e_pad = _round_up(emb_dim, LANE)
    packed = (emb_dim + n_protos) <= LANE          # pack emb+dists in 128 lanes
    p_cols = LANE if packed else _round_up(n_protos, LANE)
    out_cols = p_cols if packed else (e_pad + p_cols)

    # ---- batch tile selection -------------------------------------------
    tb = _round_up(min(tile_b, B), ROW)
    # Grid depth: v7x megacore needs >= 2 steps; >= 4 keeps the pipeline deep.
    min_steps = 4 if B >= 4 * ROW else (2 if B >= 2 * ROW else 1)
    while tb > ROW and pl.cdiv(B, tb) < min_steps:
        tb = _round_up(tb // 2, ROW)

    def working_set(t):  # double-buffered per-step VMEM estimate (bytes)
        return (2 * t * d_in * 4                     # x tile (f32)
                + 2 * t * out_cols * 4               # outputs (f32)
                + 2 * (d_in * h_pad + h_pad * e_pad) * 2   # bf16 weights
                + 2 * e_pad * p_cols * 4             # prototypes (f32)
                + (1 << 20))                         # biases / pn2 / slack

    budget = 32 << 20
    while tb > ROW and working_set(tb) > budget:
        tb = _round_up(tb // 2, ROW)
    if tb >= B:
        tb = B                                       # exact full-batch block
    grid = (pl.cdiv(B, tb),)
    vmem_limit = int(min(64 << 20, max(32 << 20, working_set(tb) + (8 << 20))))

    # ---- small operands: pad to lane-dense shapes (weights only, never x) --
    w1b = jnp.pad(w1, ((0, 0), (0, h_pad - hid))).astype(jnp.bfloat16)
    b1p = jnp.pad(b1, (0, h_pad - hid)).reshape(1, h_pad).astype(jnp.float32)
    w2b = jnp.pad(w2, ((0, h_pad - hid), (0, e_pad - emb_dim))).astype(jnp.bfloat16)
    b2p = jnp.pad(b2, (0, e_pad - emb_dim)).reshape(1, e_pad).astype(jnp.float32)

    p32 = prototypes.astype(jnp.float32)
    pn2 = jnp.sum(p32 * p32, axis=-1)                                  # [P]
    col0 = emb_dim if packed else 0        # column where prototype 0 lands
    ptp = jnp.zeros((e_pad, p_cols), jnp.float32)
    ptp = ptp.at[:emb_dim, col0:col0 + n_protos].set(p32.T)            # [Ep, Pc]
    pn2p = jnp.zeros((1, p_cols), jnp.float32)
    pn2p = pn2p.at[0, col0:col0 + n_protos].set(pn2)

    const = lambda i: (0, 0)   # weights / biases / prototypes stay VMEM-resident
    in_specs = [
        pl.BlockSpec((tb, d_in), lambda i: (i, 0)),
        pl.BlockSpec((d_in, h_pad), const),
        pl.BlockSpec((1, h_pad), const),
        pl.BlockSpec((h_pad, e_pad), const),
        pl.BlockSpec((1, e_pad), const),
        pl.BlockSpec((e_pad, p_cols), const),
        pl.BlockSpec((1, p_cols), const),
    ]
    cparams = pltpu.CompilerParams(dimension_semantics=("parallel",),
                                   vmem_limit_bytes=vmem_limit)
    args = (x_flat, w1b, b1p, w2b, b2p, ptp, pn2p)

    if packed:
        out = pl.pallas_call(
            functools.partial(protonet_kernel_packed, emb_dim=emb_dim),
            grid=grid,
            in_specs=in_specs,
            out_specs=pl.BlockSpec((tb, p_cols), lambda i: (i, 0)),
            out_shape=jax.ShapeDtypeStruct((B, p_cols), jnp.float32),
            compiler_params=cparams,
        )(*args)
        return out[:, :emb_dim], out[:, emb_dim:emb_dim + n_protos]

    emb_p, dists_p = pl.pallas_call(
        protonet_kernel_split,
        grid=grid,
        in_specs=in_specs,
        out_specs=(pl.BlockSpec((tb, e_pad), lambda i: (i, 0)),
                   pl.BlockSpec((tb, p_cols), lambda i: (i, 0))),
        out_shape=(jax.ShapeDtypeStruct((B, e_pad), jnp.float32),
                   jax.ShapeDtypeStruct((B, p_cols), jnp.float32)),
        compiler_params=cparams,
    )(*args)
    return emb_p[:, :emb_dim], dists_p[:, :n_protos]


if __name__ == "__main__":
    # Small deterministic shapes consistent with the module.
    B, C, H, W = 2, 4, 16, 16          # input image batch (NCHW)
    D_IN = C * H * W                   # 1024
    HIDDEN = 32
    EMB_DIM = 32                       # encoder.output_size
    N_PROTOS = 8

    key = jax.random.PRNGKey(0)
    kx, kw1, kb1, kw2, kb2, kp = jax.random.split(key, 6)

    x = jax.random.normal(kx, (B, C, H, W), dtype=jnp.float32)
    w1 = jax.random.normal(kw1, (D_IN, HIDDEN), dtype=jnp.float32) * 0.05
    b1 = jax.random.normal(kb1, (HIDDEN,), dtype=jnp.float32) * 0.05
    w2 = jax.random.normal(kw2, (HIDDEN, EMB_DIM), dtype=jnp.float32) * 0.05
    b2 = jax.random.normal(kb2, (EMB_DIM,), dtype=jnp.float32) * 0.05
    # nn.Parameter(torch.rand((n_protos, output_size))) -> uniform [0, 1)
    prototypes = jax.random.uniform(kp, (N_PROTOS, EMB_DIM), dtype=jnp.float32)

    emb, dists = protonet_forward(x, w1, b1, w2, b2, prototypes)
    jax.block_until_ready((emb, dists))
    assert emb.shape == (B, EMB_DIM) and dists.shape == (B, N_PROTOS)

    # Tight reference: mirror the kernel's bf16-input / f32-accumulate encoder;
    # the distance epilogue is full f32 in the kernel, so compare directly.
    x_flat = x.reshape(B, -1)
    h_ref = jnp.maximum(
        jnp.dot(x_flat.astype(jnp.bfloat16), w1.astype(jnp.bfloat16),
                preferred_element_type=jnp.float32) + b1, 0.0)
    emb_ref = jnp.dot(h_ref.astype(jnp.bfloat16), w2.astype(jnp.bfloat16),
                      preferred_element_type=jnp.float32) + b2
    dists_ref = -jnp.linalg.norm(emb_ref[:, None, :] - prototypes[None, :, :], axis=-1)
    assert jnp.allclose(emb, emb_ref, atol=5e-3, rtol=5e-3)
    assert jnp.allclose(dists, dists_ref, atol=5e-3, rtol=5e-3)

    # Loose sanity check vs. the full-f32 PyTorch semantics (bf16 encoder
    # matmul inputs introduce only small relative error at these scales).
    h32 = jnp.maximum(x_flat @ w1 + b1, 0.0)
    emb32 = h32 @ w2 + b2
    dists32 = -jnp.linalg.norm(emb32[:, None, :] - prototypes[None, :, :], axis=-1)
    assert jnp.allclose(emb, emb32, atol=0.1, rtol=0.1)
    assert jnp.allclose(dists, dists32, atol=0.2, rtol=0.1)

    print("KERNEL_OK")
</pallas_src>

<mosaic_0001>
module attributes {stable_mosaic.version = 11 : i64} {
  func.func @protonet_kernel_packed(%arg0: i32, %arg1: memref<2x1024xf32, #tpu.memory_space<vmem>>, %arg2: memref<1024x128xbf16, #tpu.memory_space<vmem>>, %arg3: memref<1x128xf32, #tpu.memory_space<vmem>>, %arg4: memref<128x128xbf16, #tpu.memory_space<vmem>>, %arg5: memref<1x128xf32, #tpu.memory_space<vmem>>, %arg6: memref<128x128xf32, #tpu.memory_space<vmem>>, %arg7: memref<1x128xf32, #tpu.memory_space<vmem>>, %arg8: memref<2x128xf32, #tpu.memory_space<vmem>>) attributes {dimension_semantics = [#tpu.dimension_semantics<parallel>], iteration_bounds = array<i64: 1>, scalar_prefetch = 0 : i64, scratch_operands = 0 : i64, tpu.core_type = #tpu.core_type<tc>, window_params = [{transform_indices = @transform_0, window_bounds = array<i64: 2, 1024>}, {pipeline_mode = #tpu.pipeline_mode<synchronous>, transform_indices = @transform_1, window_bounds = array<i64: 1024, 128>}, {pipeline_mode = #tpu.pipeline_mode<synchronous>, transform_indices = @transform_2, window_bounds = array<i64: 1, 128>}, {pipeline_mode = #tpu.pipeline_mode<synchronous>, transform_indices = @transform_3, window_bounds = array<i64: 128, 128>}, {pipeline_mode = #tpu.pipeline_mode<synchronous>, transform_indices = @transform_4, window_bounds = array<i64: 1, 128>}, {pipeline_mode = #tpu.pipeline_mode<synchronous>, transform_indices = @transform_5, window_bounds = array<i64: 128, 128>}, {pipeline_mode = #tpu.pipeline_mode<synchronous>, transform_indices = @transform_6, window_bounds = array<i64: 1, 128>}, {transform_indices = @transform_7, window_bounds = array<i64: 2, 128>}]} {
    %c0 = arith.constant 0 : index
    %c0_0 = arith.constant 0 : index
    %0 = vector.load %arg1[%c0, %c0_0] : memref<2x1024xf32, #tpu.memory_space<vmem>>, vector<2x1024xf32>
    %1 = arith.truncf %0 : vector<2x1024xf32> to vector<2x1024xbf16>
    %c0_1 = arith.constant 0 : index
    %c0_2 = arith.constant 0 : index
    %2 = vector.load %arg2[%c0_1, %c0_2] : memref<1024x128xbf16, #tpu.memory_space<vmem>>, vector<1024x128xbf16>
    %cst = arith.constant dense<0.000000e+00> : vector<2x128xf32>
    %3 = tpu.matmul %1, %2, %cst {dimension_numbers = #tpu.dot_dimension_numbers<[1], [0], [0], [1], [0, 0, 1, 1], [], []>} : vector<2x1024xbf16>, vector<1024x128xbf16>, vector<2x128xf32> -> vector<2x128xf32>
    %c0_3 = arith.constant 0 : index
    %c0_4 = arith.constant 0 : index
    %4 = vector.load %arg3[%c0_3, %c0_4] : memref<1x128xf32, #tpu.memory_space<vmem>>, vector<1x128xf32>
    %5 = vector.broadcast %4 : vector<1x128xf32> to vector<2x128xf32>
    %6 = arith.addf %3, %5 : vector<2x128xf32>
    %cst_5 = arith.constant 0.000000e+00 : f32
    %7 = vector.broadcast %cst_5 : f32 to vector<2x128xf32>
    %8 = arith.maximumf %6, %7 : vector<2x128xf32>
    %9 = arith.truncf %8 : vector<2x128xf32> to vector<2x128xbf16>
    %c0_6 = arith.constant 0 : index
    %c0_7 = arith.constant 0 : index
    %10 = vector.load %arg4[%c0_6, %c0_7] : memref<128x128xbf16, #tpu.memory_space<vmem>>, vector<128x128xbf16>
    %cst_8 = arith.constant dense<0.000000e+00> : vector<2x128xf32>
    %11 = tpu.matmul %9, %10, %cst_8 {dimension_numbers = #tpu.dot_dimension_numbers<[1], [0], [0], [1], [0, 0, 1, 1], [], []>} : vector<2x128xbf16>, vector<128x128xbf16>, vector<2x128xf32> -> vector<2x128xf32>
    %c0_9 = arith.constant 0 : index
    %c0_10 = arith.constant 0 : index
    %12 = vector.load %arg5[%c0_9, %c0_10] : memref<1x128xf32, #tpu.memory_space<vmem>>, vector<1x128xf32>
    %13 = vector.broadcast %12 : vector<1x128xf32> to vector<2x128xf32>
    %14 = arith.addf %11, %13 : vector<2x128xf32>
    %c0_11 = arith.constant 0 : index
    %c0_12 = arith.constant 0 : index
    %15 = vector.load %arg6[%c0_11, %c0_12] : memref<128x128xf32, #tpu.memory_space<vmem>>, vector<128x128xf32>
    %cst_13 = arith.constant dense<0.000000e+00> : vector<2x128xf32>
    %16 = tpu.matmul %14, %15, %cst_13 {dimension_numbers = #tpu.dot_dimension_numbers<[1], [0], [0], [1], [0, 0, 1, 1], [], []>} : vector<2x128xf32>, vector<128x128xf32>, vector<2x128xf32> -> vector<2x128xf32>
    %17 = arith.mulf %14, %14 : vector<2x128xf32>
    %cst_14 = arith.constant dense<0.000000e+00> : vector<2xf32>
    %18 = vector.multi_reduction <add>, %17, %cst_14 [1] : vector<2x128xf32> to vector<2xf32>
    %19 = vector.shape_cast %18 : vector<2xf32> to vector<2x1xf32>
    %c0_15 = arith.constant 0 : index
    %c0_16 = arith.constant 0 : index
    %20 = vector.load %arg7[%c0_15, %c0_16] : memref<1x128xf32, #tpu.memory_space<vmem>>, vector<1x128xf32>
    %21 = vector.broadcast %19 : vector<2x1xf32> to vector<2x128xf32>
    %22 = vector.broadcast %20 : vector<1x128xf32> to vector<2x128xf32>
    %23 = arith.addf %21, %22 : vector<2x128xf32>
    %cst_17 = arith.constant 2.000000e+00 : f32
    %24 = vector.broadcast %cst_17 : f32 to vector<2x128xf32>
    %25 = arith.mulf %24, %16 : vector<2x128xf32>
    %26 = arith.subf %23, %25 : vector<2x128xf32>
    %cst_18 = arith.constant 0.000000e+00 : f32
    %27 = vector.broadcast %cst_18 : f32 to vector<2x128xf32>
    %28 = arith.maximumf %26, %27 : vector<2x128xf32>
    %29 = math.sqrt %28 : vector<2x128xf32>
    %cst_19 = arith.constant 0.000000e+00 : f32
    %30 = vector.broadcast %cst_19 : f32 to vector<2x128xf32>
    %31 = arith.subf %30, %29 : vector<2x128xf32>
    %32 = tpu.iota {dimensions = array<i32: 1>} : vector<2x128xi32>
    %c32_i32 = arith.constant 32 : i32
    %33 = vector.broadcast %c32_i32 : i32 to vector<2x128xi32>
    %34 = arith.cmpi slt, %32, %33 : vector<2x128xi32>
    %35 = arith.select %34, %14, %31 : vector<2x128xi1>, vector<2x128xf32>
    %c0_20 = arith.constant 0 : index
    %c0_21 = arith.constant 0 : index
    %36 = vector.load %arg8[%c0_20, %c0_21] : memref<2x128xf32, #tpu.memory_space<vmem>>, vector<2x128xf32>
    tpu.vector_store %arg8[%c0_20, %c0_21], %35 {strides = array<i32>} : memref<2x128xf32, #tpu.memory_space<vmem>>, vector<2x128xf32>,
    return
  }
  func.func @transform_0(%arg0: i32) -> (i32, i32) {
    %c0_i32 = arith.constant 0 : i32
    %c0_i32_0 = arith.constant 0 : i32
    return %arg0, %c0_i32 : i32, i32
  }
  func.func @transform_1(%arg0: i32) -> (i32, i32) {
    %c0_i32 = arith.constant 0 : i32
    %c0_i32_0 = arith.constant 0 : i32
    %c0_i32_1 = arith.constant 0 : i32
    return %c0_i32, %c0_i32_0 : i32, i32
  }
  func.func @transform_2(%arg0: i32) -> (i32, i32) {
    %c0_i32 = arith.constant 0 : i32
    %c0_i32_0 = arith.constant 0 : i32
    %c0_i32_1 = arith.constant 0 : i32
    return %c0_i32, %c0_i32_0 : i32, i32
  }
  func.func @transform_3(%arg0: i32) -> (i32, i32) {
    %c0_i32 = arith.constant 0 : i32
    %c0_i32_0 = arith.constant 0 : i32
    %c0_i32_1 = arith.constant 0 : i32
    return %c0_i32, %c0_i32_0 : i32, i32
  }
  func.func @transform_4(%arg0: i32) -> (i32, i32) {
    %c0_i32 = arith.constant 0 : i32
    %c0_i32_0 = arith.constant 0 : i32
    %c0_i32_1 = arith.constant 0 : i32
    return %c0_i32, %c0_i32_0 : i32, i32
  }
  func.func @transform_5(%arg0: i32) -> (i32, i32) {
    %c0_i32 = arith.constant 0 : i32
    %c0_i32_0 = arith.constant 0 : i32
    %c0_i32_1 = arith.constant 0 : i32
    return %c0_i32, %c0_i32_0 : i32, i32
  }
  func.func @transform_6(%arg0: i32) -> (i32, i32) {
    %c0_i32 = arith.constant 0 : i32
    %c0_i32_0 = arith.constant 0 : i32
    %c0_i32_1 = arith.constant 0 : i32
    return %c0_i32, %c0_i32_0 : i32, i32
  }
  func.func @transform_7(%arg0: i32) -> (i32, i32) {
    %c0_i32 = arith.constant 0 : i32
    %c0_i32_0 = arith.constant 0 : i32
    return %arg0, %c0_i32 : i32, i32
  }
}

</mosaic_0001>

<llo_original>
// kernel: protonet_forward.1
$region0: #{protonet_forward.1}
  #allocation0 [shape = 'u32[]', space=smem, size = 0x4, offset = 0x4, fixed_abs, tag = 'smem constant byte address 0x4 - core index']
  #allocation1 [shape = 'u32[72,128]{1,0:T(1,128)}', space=vmem, size = 0x9000, scoped, tag = 'internal scratch']
  %s0 = inlined_call_operand.vmem [shape: f32[2,1024], index: 0, kind: input, shape index: {}]
  %s1 = inlined_call_operand.vmem [shape: bf16[1024,128], index: 1, kind: input, shape index: {}]
  %s2 = inlined_call_operand.vmem [shape: f32[1,128], index: 2, kind: input, shape index: {}]
  %s3 = inlined_call_operand.vmem [shape: bf16[128,128], index: 3, kind: input, shape index: {}]
  %s4 = inlined_call_operand.vmem [shape: f32[1,128], index: 4, kind: input, shape index: {}]
  %s5 = inlined_call_operand.vmem [shape: f32[128,128], index: 5, kind: input, shape index: {}]
  %s6 = inlined_call_operand.vmem [shape: f32[1,128], index: 6, kind: input, shape index: {}]
  %s7 = inlined_call_operand.vmem [shape: f32[2,128], index: 7, kind: output, shape index: {}]
  %s8 = sld [smem:[#allocation0]]
  $region38: #{protonet_forward.1} parent=0
    _
  %s10 = ssub.s32 1, %s8
  %s11 = scalar_select 0, %s10, %s8
  // Predicated region
  $region2: #{protonet_forward.1} parent=0 // pred_check
    _
  $region3: #{protonet_forward.1} parent=0 // pred_check_branch
    %13 = sbr.rel (0) target = $region5
  $region4: #{protonet_forward.1} parent=0 // pred_region
    _
  $region5: #{protonet_forward.1} parent=0 // pred_fallthru
    _
  // Predicated region
  $region6: #{protonet_forward.1} parent=0 // pred_check
    _
  $region7: #{protonet_forward.1} parent=0 // pred_check_branch
    %15 = sbr.rel (0) target = $region9
  $region8: #{protonet_forward.1} parent=0 // pred_region
    _
  $region9: #{protonet_forward.1} parent=0 // pred_fallthru
    _
  // Predicated region
  $region10: #{protonet_forward.1} parent=0 // pred_check
    _
  $region11: #{protonet_forward.1} parent=0 // pred_check_branch
    %17 = sbr.rel (0) target = $region13
  $region12: #{protonet_forward.1} parent=0 // pred_region
    _
  $region13: #{protonet_forward.1} parent=0 // pred_fallthru
    _
  // Predicated region
  $region14: #{protonet_forward.1} parent=0 // pred_check
    _
  $region15: #{protonet_forward.1} parent=0 // pred_check_branch
    %19 = sbr.rel (0) target = $region17
  $region16: #{protonet_forward.1} parent=0 // pred_region
    _
  $region17: #{protonet_forward.1} parent=0 // pred_fallthru
    _
  // Predicated region
  $region18: #{protonet_forward.1} parent=0 // pred_check
    _
  $region19: #{protonet_forward.1} parent=0 // pred_check_branch
    %21 = sbr.rel (0) target = $region21
  $region20: #{protonet_forward.1} parent=0 // pred_region
    _
  $region21: #{protonet_forward.1} parent=0 // pred_fallthru
    _
  // Predicated region
  $region22: #{protonet_forward.1} parent=0 // pred_check
    _
  $region23: #{protonet_forward.1} parent=0 // pred_check_branch
    %23 = sbr.rel (0) target = $region25
  $region24: #{protonet_forward.1} parent=0 // pred_region
    _
  $region25: #{protonet_forward.1} parent=0 // pred_fallthru
    _
  // Predicated region
  $region26: #{protonet_forward.1} parent=0 // pred_check
    _
  $region27: #{protonet_forward.1} parent=0 // pred_check_branch
    %25 = sbr.rel (0) target = $region29
  $region28: #{protonet_forward.1} parent=0 // pred_region
    _
  $region29: #{protonet_forward.1} parent=0 // pred_fallthru
    _
  %v26 = vld [vmem:[%s0] sm:$0xff]
  %v27 = vld [vmem:[%s0 + $0x8] sm:$0xff]
  %30 = vst [vmem:[#allocation1] ss:$4 sm:$0xff] %v26
  %s31 = scalar_lea.vmem [#allocation1], 32
  %32 = vst [vmem:[%s31] ss:$4 sm:$0xff] %v27
  %v33 = vld.sshfl [vmem:[#allocation1] sm:$0xff pattern:$0x73625140]
  %v34 = vld.sshfl [vmem:[#allocation1 + $0x8] sm:$0xff pattern:$0x73625140]
  %v35 = vld.sshfl [vmem:[#allocation1 + $0x10] sm:$0xff pattern:$0x73625140]
  %v36 = vld.sshfl [vmem:[#allocation1 + $0x18] sm:$0xff pattern:$0x73625140]
  %v37 = vld.sshfl [vmem:[#allocation1 + $0x20] sm:$0xff pattern:$0x73625140]
  %v38 = vld.sshfl [vmem:[#allocation1 + $0x28] sm:$0xff pattern:$0x73625140]
  %v39 = vld.sshfl [vmem:[#allocation1 + $0x30] sm:$0xff pattern:$0x73625140]
  %v40 = vld.sshfl [vmem:[#allocation1 + $0x38] sm:$0xff pattern:$0x73625140]
  %v49 = vpack.c.bf16 %v33, %v33
  %v50 = vpack.c.bf16 %v34, %v34
  %v51 = vpack.c.bf16 %v35, %v35
  %v52 = vpack.c.bf16 %v36, %v36
  %v53 = vpack.c.bf16 %v37, %v37
  %v54 = vpack.c.bf16 %v38, %v38
  %v55 = vpack.c.bf16 %v39, %v39
  %v56 = vpack.c.bf16 %v40, %v40
  %v57 = vld [vmem:[%s1] sm:$0xf]
  %v58 = vld [vmem:[%s1 + $0x4] sm:$0xf]
  %v59 = vld [vmem:[%s1 + $0x8] sm:$0xf]
  %v60 = vld [vmem:[%s1 + $0xc] sm:$0xf]
  %v61 = vld [vmem:[%s1 + $0x10] sm:$0xf]
  %v62 = vld [vmem:[%s1 + $0x14] sm:$0xf]
  %v63 = vld [vmem:[%s1 + $0x18] sm:$0xf]
  %v64 = vld [vmem:[%s1 + $0x1c] sm:$0xf]
  %v65 = vld [vmem:[%s1 + $0x20] sm:$0xf]
  %v66 = vld [vmem:[%s1 + $0x24] sm:$0xf]
  %v67 = vld [vmem:[%s1 + $0x28] sm:$0xf]
  %v68 = vld [vmem:[%s1 + $0x2c] sm:$0xf]
  %v69 = vld [vmem:[%s1 + $0x30] sm:$0xf]
  %v70 = vld [vmem:[%s1 + $0x34] sm:$0xf]
  %v71 = vld [vmem:[%s1 + $0x38] sm:$0xf]
  %v72 = vld [vmem:[%s1 + $0x3c] sm:$0xf]
  %v73 = vld [vmem:[%s1 + $0x40] sm:$0xf]
  %v74 = vld [vmem:[%s1 + $0x44] sm:$0xf]
  %v75 = vld [vmem:[%s1 + $0x48] sm:$0xf]
  %v76 = vld [vmem:[%s1 + $0x4c] sm:$0xf]
  %v77 = vld [vmem:[%s1 + $0x50] sm:$0xf]
  %v78 = vld [vmem:[%s1 + $0x54] sm:$0xf]
  %v79 = vld [vmem:[%s1 + $0x58] sm:$0xf]
  %v80 = vld [vmem:[%s1 + $0x5c] sm:$0xf]
  %v81 = vld [vmem:[%s1 + $0x60] sm:$0xf]
  %v82 = vld [vmem:[%s1 + $0x64] sm:$0xf]
  %v83 = vld [vmem:[%s1 + $0x68] sm:$0xf]
  %v84 = vld [vmem:[%s1 + $0x6c] sm:$0xf]
  %v85 = vld [vmem:[%s1 + $0x70] sm:$0xf]
  %v86 = vld [vmem:[%s1 + $0x74] sm:$0xf]
  %v87 = vld [vmem:[%s1 + $0x78] sm:$0xf]
  %v88 = vld [vmem:[%s1 + $0x7c] sm:$0xf]
  %v89 = vld [vmem:[%s1 + $0x80] sm:$0xf]
  %v90 = vld [vmem:[%s1 + $0x84] sm:$0xf]
  %v91 = vld [vmem:[%s1 + $0x88] sm:$0xf]
  %v92 = vld [vmem:[%s1 + $0x8c] sm:$0xf]
  %v93 = vld [vmem:[%s1 + $0x90] sm:$0xf]
  %v94 = vld [vmem:[%s1 + $0x94] sm:$0xf]
  %v95 = vld [vmem:[%s1 + $0x98] sm:$0xf]
  %v96 = vld [vmem:[%s1 + $0x9c] sm:$0xf]
  %v97 = vld [vmem:[%s1 + $0xa0] sm:$0xf]
  %v98 = vld [vmem:[%s1 + $0xa4] sm:$0xf]
  %v99 = vld [vmem:[%s1 + $0xa8] sm:$0xf]
  %v100 = vld [vmem:[%s1 + $0xac] sm:$0xf]
  %v101 = vld [vmem:[%s1 + $0xb0] sm:$0xf]
  %v102 = vld [vmem:[%s1 + $0xb4] sm:$0xf]
  %v103 = vld [vmem:[%s1 + $0xb8] sm:$0xf]
  %v104 = vld [vmem:[%s1 + $0xbc] sm:$0xf]
  %v105 = vld [vmem:[%s1 + $0xc0] sm:$0xf]
  %v106 = vld [vmem:[%s1 + $0xc4] sm:$0xf]
  %v107 = vld [vmem:[%s1 + $0xc8] sm:$0xf]
  %v108 = vld [vmem:[%s1 + $0xcc] sm:$0xf]
  %v109 = vld [vmem:[%s1 + $0xd0] sm:$0xf]
  %v110 = vld [vmem:[%s1 + $0xd4] sm:$0xf]
  %v111 = vld [vmem:[%s1 + $0xd8] sm:$0xf]
  %v112 = vld [vmem:[%s1 + $0xdc] sm:$0xf]
  %v113 = vld [vmem:[%s1 + $0xe0] sm:$0xf]
  %v114 = vld [vmem:[%s1 + $0xe4] sm:$0xf]
  %v115 = vld [vmem:[%s1 + $0xe8] sm:$0xf]
  %v116 = vld [vmem:[%s1 + $0xec] sm:$0xf]
  %v117 = vld [vmem:[%s1 + $0xf0] sm:$0xf]
  %v118 = vld [vmem:[%s1 + $0xf4] sm:$0xf]
  %v119 = vld [vmem:[%s1 + $0xf8] sm:$0xf]
  %v120 = vld [vmem:[%s1 + $0xfc] sm:$0xf]
  %v121 = vld [vmem:[%s1 + $0x100] sm:$0xf]
  %v122 = vld [vmem:[%s1 + $0x104] sm:$0xf]
  %v123 = vld [vmem:[%s1 + $0x108] sm:$0xf]
  %v124 = vld [vmem:[%s1 + $0x10c] sm:$0xf]
  %v125 = vld [vmem:[%s1 + $0x110] sm:$0xf]
  %v126 = vld [vmem:[%s1 + $0x114] sm:$0xf]
  %v127 = vld [vmem:[%s1 + $0x118] sm:$0xf]
  %v128 = vld [vmem:[%s1 + $0x11c] sm:$0xf]
  %v129 = vld [vmem:[%s1 + $0x120] sm:$0xf]
  %v130 = vld [vmem:[%s1 + $0x124] sm:$0xf]
  %v131 = vld [vmem:[%s1 + $0x128] sm:$0xf]
  %v132 = vld [vmem:[%s1 + $0x12c] sm:$0xf]
  %v133 = vld [vmem:[%s1 + $0x130] sm:$0xf]
  %v134 = vld [vmem:[%s1 + $0x134] sm:$0xf]
  %v135 = vld [vmem:[%s1 + $0x138] sm:$0xf]
  %v136 = vld [vmem:[%s1 + $0x13c] sm:$0xf]
  %v137 = vld [vmem:[%s1 + $0x140] sm:$0xf]
  %v138 = vld [vmem:[%s1 + $0x144] sm:$0xf]
  %v139 = vld [vmem:[%s1 + $0x148] sm:$0xf]
  %v140 = vld [vmem:[%s1 + $0x14c] sm:$0xf]
  %v141 = vld [vmem:[%s1 + $0x150] sm:$0xf]
  %v142 = vld [vmem:[%s1 + $0x154] sm:$0xf]
  %v143 = vld [vmem:[%s1 + $0x158] sm:$0xf]
  %v144 = vld [vmem:[%s1 + $0x15c] sm:$0xf]
  %v145 = vld [vmem:[%s1 + $0x160] sm:$0xf]
  %v146 = vld [vmem:[%s1 + $0x164] sm:$0xf]
  %v147 = vld [vmem:[%s1 + $0x168] sm:$0xf]
  %v148 = vld [vmem:[%s1 + $0x16c] sm:$0xf]
  %v149 = vld [vmem:[%s1 + $0x170] sm:$0xf]
  %v150 = vld [vmem:[%s1 + $0x174] sm:$0xf]
  %v151 = vld [vmem:[%s1 + $0x178] sm:$0xf]
  %v152 = vld [vmem:[%s1 + $0x17c] sm:$0xf]
  %v153 = vld [vmem:[%s1 + $0x180] sm:$0xf]
  %v154 = vld [vmem:[%s1 + $0x184] sm:$0xf]
  %v155 = vld [vmem:[%s1 + $0x188] sm:$0xf]
  %v156 = vld [vmem:[%s1 + $0x18c] sm:$0xf]
  %v157 = vld [vmem:[%s1 + $0x190] sm:$0xf]
  %v158 = vld [vmem:[%s1 + $0x194] sm:$0xf]
  %v159 = vld [vmem:[%s1 + $0x198] sm:$0xf]
  %v160 = vld [vmem:[%s1 + $0x19c] sm:$0xf]
  %v161 = vld [vmem:[%s1 + $0x1a0] sm:$0xf]
  %v162 = vld [vmem:[%s1 + $0x1a4] sm:$0xf]
  %v163 = vld [vmem:[%s1 + $0x1a8] sm:$0xf]
  %v164 = vld [vmem:[%s1 + $0x1ac] sm:$0xf]
  %v165 = vld [vmem:[%s1 + $0x1b0] sm:$0xf]
  %v166 = vld [vmem:[%s1 + $0x1b4] sm:$0xf]
  %v167 = vld [vmem:[%s1 + $0x1b8] sm:$0xf]
  %v168 = vld [vmem:[%s1 + $0x1bc] sm:$0xf]
  %v169 = vld [vmem:[%s1 + $0x1c0] sm:$0xf]
  %v170 = vld [vmem:[%s1 + $0x1c4] sm:$0xf]
  %v171 = vld [vmem:[%s1 + $0x1c8] sm:$0xf]
  %v172 = vld [vmem:[%s1 + $0x1cc] sm:$0xf]
  %v173 = vld [vmem:[%s1 + $0x1d0] sm:$0xf]
  %v174 = vld [vmem:[%s1 + $0x1d4] sm:$0xf]
  %v175 = vld [vmem:[%s1 + $0x1d8] sm:$0xf]
  %v176 = vld [vmem:[%s1 + $0x1dc] sm:$0xf]
  %v177 = vld [vmem:[%s1 + $0x1e0] sm:$0xf]
  %v178 = vld [vmem:[%s1 + $0x1e4] sm:$0xf]
  %v179 = vld [vmem:[%s1 + $0x1e8] sm:$0xf]
  %v180 = vld [vmem:[%s1 + $0x1ec] sm:$0xf]
  %v181 = vld [vmem:[%s1 + $0x1f0] sm:$0xf]
  %v182 = vld [vmem:[%s1 + $0x1f4] sm:$0xf]
  %v183 = vld [vmem:[%s1 + $0x1f8] sm:$0xf]
  %v184 = vld [vmem:[%s1 + $0x1fc] sm:$0xf]
  %v185 = vld [vmem:[%s2] sm:$0x1]
  %v187 = vperm.slane %v185, 0
  %v317 = vunpack.c.l.b16 %v57
  %v318 = vunpack.c.l.b16 %v58
  %v319 = vunpack.c.l.b16 %v59
  %v320 = vunpack.c.l.b16 %v60
  %v321 = vunpack.c.l.b16 %v61
  %v322 = vunpack.c.l.b16 %v62
  %v323 = vunpack.c.l.b16 %v63
  %v324 = vunpack.c.l.b16 %v64
  %v325 = vunpack.c.l.b16 %v65
  %v326 = vunpack.c.l.b16 %v66
  %v327 = vunpack.c.l.b16 %v67
  %v328 = vunpack.c.l.b16 %v68
  %v329 = vunpack.c.l.b16 %v69
  %v330 = vunpack.c.l.b16 %v70
  %v331 = vunpack.c.l.b16 %v71
  %v332 = vunpack.c.l.b16 %v72
  %v333 = vunpack.c.l.b16 %v73
  %v334 = vunpack.c.l.b16 %v74
  %v335 = vunpack.c.l.b16 %v75
  %v336 = vunpack.c.l.b16 %v76
  %v337 = vunpack.c.l.b16 %v77
  %v338 = vunpack.c.l.b16 %v78
  %v339 = vunpack.c.l.b16 %v79
  %v340 = vunpack.c.l.b16 %v80
  %v341 = vunpack.c.l.b16 %v81
  %v342 = vunpack.c.l.b16 %v82
  %v343 = vunpack.c.l.b16 %v83
  %v344 = vunpack.c.l.b16 %v84
  %v345 = vunpack.c.l.b16 %v85
  %v346 = vunpack.c.l.b16 %v86
  %v347 = vunpack.c.l.b16 %v87
  %v348 = vunpack.c.l.b16 %v88
  %v349 = vunpack.c.l.b16 %v89
  %v350 = vunpack.c.l.b16 %v90
  %v351 = vunpack.c.l.b16 %v91
  %v352 = vunpack.c.l.b16 %v92
  %v353 = vunpack.c.l.b16 %v93
  %v354 = vunpack.c.l.b16 %v94
  %v355 = vunpack.c.l.b16 %v95
  %v356 = vunpack.c.l.b16 %v96
  %v357 = vunpack.c.l.b16 %v97
  %v358 = vunpack.c.l.b16 %v98
  %v359 = vunpack.c.l.b16 %v99
  %v360 = vunpack.c.l.b16 %v100
  %v361 = vunpack.c.l.b16 %v101
  %v362 = vunpack.c.l.b16 %v102
  %v363 = vunpack.c.l.b16 %v103
  %v364 = vunpack.c.l.b16 %v104
  %v365 = vunpack.c.l.b16 %v105
  %v366 = vunpack.c.l.b16 %v106
  %v367 = vunpack.c.l.b16 %v107
  %v368 = vunpack.c.l.b16 %v108
  %v369 = vunpack.c.l.b16 %v109
  %v370 = vunpack.c.l.b16 %v110
  %v371 = vunpack.c.l.b16 %v111
  %v372 = vunpack.c.l.b16 %v112
  %v373 = vunpack.c.l.b16 %v113
  %v374 = vunpack.c.l.b16 %v114
  %v375 = vunpack.c.l.b16 %v115
  %v376 = vunpack.c.l.b16 %v116
  %v377 = vunpack.c.l.b16 %v117
  %v378 = vunpack.c.l.b16 %v118
  %v379 = vunpack.c.l.b16 %v119
  %v380 = vunpack.c.l.b16 %v120
  %v381 = vunpack.c.l.b16 %v121
  %v382 = vunpack.c.l.b16 %v122
  %v383 = vunpack.c.l.b16 %v123
  %v384 = vunpack.c.l.b16 %v124
  %v385 = vunpack.c.l.b16 %v125
  %v386 = vunpack.c.l.b16 %v126
  %v387 = vunpack.c.l.b16 %v127
  %v388 = vunpack.c.l.b16 %v128
  %v389 = vunpack.c.l.b16 %v129
  %v390 = vunpack.c.l.b16 %v130
  %v391 = vunpack.c.l.b16 %v131
  %v392 = vunpack.c.l.b16 %v132
  %v393 = vunpack.c.l.b16 %v133
  %v394 = vunpack.c.l.b16 %v134
  %v395 = vunpack.c.l.b16 %v135
  %v396 = vunpack.c.l.b16 %v136
  %v397 = vunpack.c.l.b16 %v137
  %v398 = vunpack.c.l.b16 %v138
  %v399 = vunpack.c.l.b16 %v139
  %v400 = vunpack.c.l.b16 %v140
  %v401 = vunpack.c.l.b16 %v141
  %v402 = vunpack.c.l.b16 %v142
  %v403 = vunpack.c.l.b16 %v143
  %v404 = vunpack.c.l.b16 %v144
  %v405 = vunpack.c.l.b16 %v145
  %v406 = vunpack.c.l.b16 %v146
  %v407 = vunpack.c.l.b16 %v147
  %v408 = vunpack.c.l.b16 %v148
  %v409 = vunpack.c.l.b16 %v149
  %v410 = vunpack.c.l.b16 %v150
  %v411 = vunpack.c.l.b16 %v151
  %v412 = vunpack.c.l.b16 %v152
  %v413 = vunpack.c.l.b16 %v153
  %v414 = vunpack.c.l.b16 %v154
  %v415 = vunpack.c.l.b16 %v155
  %v416 = vunpack.c.l.b16 %v156
  %v417 = vunpack.c.l.b16 %v157
  %v418 = vunpack.c.l.b16 %v158
  %v419 = vunpack.c.l.b16 %v159
  %v420 = vunpack.c.l.b16 %v160
  %v421 = vunpack.c.l.b16 %v161
  %v422 = vunpack.c.l.b16 %v162
  %v423 = vunpack.c.l.b16 %v163
  %v424 = vunpack.c.l.b16 %v164
  %v425 = vunpack.c.l.b16 %v165
  %v426 = vunpack.c.l.b16 %v166
  %v427 = vunpack.c.l.b16 %v167
  %v428 = vunpack.c.l.b16 %v168
  %v429 = vunpack.c.l.b16 %v169
  %v430 = vunpack.c.l.b16 %v170
  %v431 = vunpack.c.l.b16 %v171
  %v432 = vunpack.c.l.b16 %v172
  %v433 = vunpack.c.l.b16 %v173
  %v434 = vunpack.c.l.b16 %v174
  %v435 = vunpack.c.l.b16 %v175
  %v436 = vunpack.c.l.b16 %v176
  %v437 = vunpack.c.l.b16 %v177
  %v438 = vunpack.c.l.b16 %v178
  %v439 = vunpack.c.l.b16 %v179
  %v440 = vunpack.c.l.b16 %v180
  %v441 = vunpack.c.l.b16 %v181
  %v442 = vunpack.c.l.b16 %v182
  %v443 = vunpack.c.l.b16 %v183
  %v444 = vunpack.c.l.b16 %v184
  %v445 = vpack.c.b16 %v318, %v317
  %v446 = vpack.c.b16 %v320, %v319
  %v447 = vpack.c.b16 %v322, %v321
  %v448 = vpack.c.b16 %v324, %v323
  %v449 = vpack.c.b16 %v326, %v325
  %v450 = vpack.c.b16 %v328, %v327
  %v451 = vpack.c.b16 %v330, %v329
  %v452 = vpack.c.b16 %v332, %v331
  %v453 = vpack.c.b16 %v334, %v333
  %v454 = vpack.c.b16 %v336, %v335
  %v455 = vpack.c.b16 %v338, %v337
  %v456 = vpack.c.b16 %v340, %v339
  %v457 = vpack.c.b16 %v342, %v341
  %v458 = vpack.c.b16 %v344, %v343
  %v459 = vpack.c.b16 %v346, %v345
  %v460 = vpack.c.b16 %v348, %v347
  %v461 = vpack.c.b16 %v350, %v349
  %v462 = vpack.c.b16 %v352, %v351
  %v463 = vpack.c.b16 %v354, %v353
  %v464 = vpack.c.b16 %v356, %v355
  %v465 = vpack.c.b16 %v358, %v357
  %v466 = vpack.c.b16 %v360, %v359
  %v467 = vpack.c.b16 %v362, %v361
  %v468 = vpack.c.b16 %v364, %v363
  %v469 = vpack.c.b16 %v366, %v365
  %v470 = vpack.c.b16 %v368, %v367
  %v471 = vpack.c.b16 %v370, %v369
  %v472 = vpack.c.b16 %v372, %v371
  %v473 = vpack.c.b16 %v374, %v373
  %v474 = vpack.c.b16 %v376, %v375
  %v475 = vpack.c.b16 %v378, %v377
  %v476 = vpack.c.b16 %v380, %v379
  %v477 = vpack.c.b16 %v382, %v381
  %v478 = vpack.c.b16 %v384, %v383
  %v479 = vpack.c.b16 %v386, %v385
  %v480 = vpack.c.b16 %v388, %v387
  %v481 = vpack.c.b16 %v390, %v389
  %v482 = vpack.c.b16 %v392, %v391
  %v483 = vpack.c.b16 %v394, %v393
  %v484 = vpack.c.b16 %v396, %v395
  %v485 = vpack.c.b16 %v398, %v397
  %v486 = vpack.c.b16 %v400, %v399
  %v487 = vpack.c.b16 %v402, %v401
  %v488 = vpack.c.b16 %v404, %v403
  %v489 = vpack.c.b16 %v406, %v405
  %v490 = vpack.c.b16 %v408, %v407
  %v491 = vpack.c.b16 %v410, %v409
  %v492 = vpack.c.b16 %v412, %v411
  %v493 = vpack.c.b16 %v414, %v413
  %v494 = vpack.c.b16 %v416, %v415
  %v495 = vpack.c.b16 %v418, %v417
  %v496 = vpack.c.b16 %v420, %v419
  %v497 = vpack.c.b16 %v422, %v421
  %v498 = vpack.c.b16 %v424, %v423
  %v499 = vpack.c.b16 %v426, %v425
  %v500 = vpack.c.b16 %v428, %v427
  %v501 = vpack.c.b16 %v430, %v429
  %v502 = vpack.c.b16 %v432, %v431
  %v503 = vpack.c.b16 %v434, %v433
  %v504 = vpack.c.b16 %v436, %v435
  %v505 = vpack.c.b16 %v438, %v437
  %v506 = vpack.c.b16 %v440, %v439
  %v507 = vpack.c.b16 %v442, %v441
  %v508 = vpack.c.b16 %v444, %v443
  %573 = vmatpush.bf16.msra.mxu0 %v452
  %574 = vmatpush.bf16.msra.mxu0 %v451
  %575 = vmatpush.bf16.msra.mxu0 %v450
  %576 = vmatpush.bf16.msra.mxu0 %v449
  %577 = vmatpush.bf16.msra.mxu0 %v448
  %578 = vmatpush.bf16.msra.mxu0 %v447
  %579 = vmatpush.bf16.msra.mxu0 %v446
  %580 = vmatpush.bf16.msra.mxu0 %v445
  %581 = vmatmul.bf16.gmra.mxu0 %v49
  %v582 = vpop.f32.mrf.mxu0
  %v583 = vadd.f32 %v187, %v582
  %v584 = vpop.f32.mrf.mxu0
  %585 = vdwg.mxu0
  %586 = vmatpush.bf16.msra.mxu0 %v460
  %587 = vmatpush.bf16.msra.mxu0 %v459
  %588 = vmatpush.bf16.msra.mxu0 %v458
  %589 = vmatpush.bf16.msra.mxu0 %v457
  %590 = vmatpush.bf16.msra.mxu0 %v456
  %591 = vmatpush.bf16.msra.mxu0 %v455
  %592 = vmatpush.bf16.msra.mxu0 %v454
  %593 = vmatpush.bf16.msra.mxu0 %v453
  %594 = vmatmul.bf16.gmra.mxu0 %v50
  %v595 = vpop.f32.mrf.mxu0
  %v596 = vadd.f32 %v583, %v595
  %v597 = vpop.f32.mrf.mxu0
  %598 = vdwg.mxu0
  %599 = vmatpush.bf16.msra.mxu0 %v468
  %600 = vmatpush.bf16.msra.mxu0 %v467
  %601 = vmatpush.bf16.msra.mxu0 %v466
  %602 = vmatpush.bf16.msra.mxu0 %v465
  %603 = vmatpush.bf16.msra.mxu0 %v464
  %604 = vmatpush.bf16.msra.mxu0 %v463
  %605 = vmatpush.bf16.msra.mxu0 %v462
  %606 = vmatpush.bf16.msra.mxu0 %v461
  %607 = vmatmul.bf16.gmra.mxu0 %v51
  %v608 = vpop.f32.mrf.mxu0
  %v609 = vadd.f32 %v596, %v608
  %v610 = vpop.f32.mrf.mxu0
  %611 = vdwg.mxu0
  %612 = vmatpush.bf16.msra.mxu0 %v476
  %613 = vmatpush.bf16.msra.mxu0 %v475
  %614 = vmatpush.bf16.msra.mxu0 %v474
  %615 = vmatpush.bf16.msra.mxu0 %v473
  %616 = vmatpush.bf16.msra.mxu0 %v472
  %617 = vmatpush.bf16.msra.mxu0 %v471
  %618 = vmatpush.bf16.msra.mxu0 %v470
  %619 = vmatpush.bf16.msra.mxu0 %v469
  %620 = vmatmul.bf16.gmra.mxu0 %v52
  %v621 = vpop.f32.mrf.mxu0
  %v622 = vadd.f32 %v609, %v621
  %v623 = vpop.f32.mrf.mxu0
  %624 = vdwg.mxu0
  %625 = vmatpush.bf16.msra.mxu0 %v484
  %626 = vmatpush.bf16.msra.mxu0 %v483
  %627 = vmatpush.bf16.msra.mxu0 %v482
  %628 = vmatpush.bf16.msra.mxu0 %v481
  %629 = vmatpush.bf16.msra.mxu0 %v480
  %630 = vmatpush.bf16.msra.mxu0 %v479
  %631 = vmatpush.bf16.msra.mxu0 %v478
  %632 = vmatpush.bf16.msra.mxu0 %v477
  %633 = vmatmul.bf16.gmra.mxu0 %v53
  %v634 = vpop.f32.mrf.mxu0
  %v635 = vadd.f32 %v622, %v634
  %v636 = vpop.f32.mrf.mxu0
  %637 = vdwg.mxu0
  %638 = vmatpush.bf16.msra.mxu0 %v492
  %639 = vmatpush.bf16.msra.mxu0 %v491
  %640 = vmatpush.bf16.msra.mxu0 %v490
  %641 = vmatpush.bf16.msra.mxu0 %v489
  %642 = vmatpush.bf16.msra.mxu0 %v488
  %643 = vmatpush.bf16.msra.mxu0 %v487
  %644 = vmatpush.bf16.msra.mxu0 %v486
  %645 = vmatpush.bf16.msra.mxu0 %v485
  %646 = vmatmul.bf16.gmra.mxu0 %v54
  %v647 = vpop.f32.mrf.mxu0
  %v648 = vadd.f32 %v635, %v647
  %v649 = vpop.f32.mrf.mxu0
  %650 = vdwg.mxu0
  %651 = vmatpush.bf16.msra.mxu0 %v500
  %652 = vmatpush.bf16.msra.mxu0 %v499
  %653 = vmatpush.bf16.msra.mxu0 %v498
  %654 = vmatpush.bf16.msra.mxu0 %v497
  %655 = vmatpush.bf16.msra.mxu0 %v496
  %656 = vmatpush.bf16.msra.mxu0 %v495
  %657 = vmatpush.bf16.msra.mxu0 %v494
  %658 = vmatpush.bf16.msra.mxu0 %v493
  %659 = vmatmul.bf16.gmra.mxu0 %v55
  %v660 = vpop.f32.mrf.mxu0
  %v661 = vadd.f32 %v648, %v660
  %v662 = vpop.f32.mrf.mxu0
  %663 = vdwg.mxu0
  %664 = vmatpush.bf16.msra.mxu0 %v508
  %665 = vmatpush.bf16.msra.mxu0 %v507
  %666 = vmatpush.bf16.msra.mxu0 %v506
  %667 = vmatpush.bf16.msra.mxu0 %v505
  %668 = vmatpush.bf16.msra.mxu0 %v504
  %669 = vmatpush.bf16.msra.mxu0 %v503
  %670 = vmatpush.bf16.msra.mxu0 %v502
  %671 = vmatpush.bf16.msra.mxu0 %v501
  %672 = vmatmul.bf16.gmra.mxu0 %v56
  %v673 = vpop.f32.mrf.mxu0
  %v674 = vadd.f32 %v661, %v673
  %v675 = vpop.f32.mrf.mxu0
  %676 = vdwg.mxu0
  %v677 = vmax.f32 %v674, 0.0
  %v678 = vpack.c.bf16 %v677, %v677
  %v679 = vld [vmem:[%s3] sm:$0xf]
  %v680 = vld [vmem:[%s3 + $0x4] sm:$0xf]
  %v681 = vld [vmem:[%s3 + $0x8] sm:$0xf]
  %v682 = vld [vmem:[%s3 + $0xc] sm:$0xf]
  %v683 = vld [vmem:[%s3 + $0x10] sm:$0xf]
  %v684 = vld [vmem:[%s3 + $0x14] sm:$0xf]
  %v685 = vld [vmem:[%s3 + $0x18] sm:$0xf]
  %v686 = vld [vmem:[%s3 + $0x1c] sm:$0xf]
  %v687 = vld [vmem:[%s3 + $0x20] sm:$0xf]
  %v688 = vld [vmem:[%s3 + $0x24] sm:$0xf]
  %v689 = vld [vmem:[%s3 + $0x28] sm:$0xf]
  %v690 = vld [vmem:[%s3 + $0x2c] sm:$0xf]
  %v691 = vld [vmem:[%s3 + $0x30] sm:$0xf]
  %v692 = vld [vmem:[%s3 + $0x34] sm:$0xf]
  %v693 = vld [vmem:[%s3 + $0x38] sm:$0xf]
  %v694 = vld [vmem:[%s3 + $0x3c] sm:$0xf]
  %v695 = vld [vmem:[%s4] sm:$0x1]
  %v697 = vperm.slane %v695, 0
  %v715 = vunpack.c.l.b16 %v679
  %v716 = vunpack.c.l.b16 %v680
  %v717 = vunpack.c.l.b16 %v681
  %v718 = vunpack.c.l.b16 %v682
  %v719 = vunpack.c.l.b16 %v683
  %v720 = vunpack.c.l.b16 %v684
  %v721 = vunpack.c.l.b16 %v685
  %v722 = vunpack.c.l.b16 %v686
  %v723 = vunpack.c.l.b16 %v687
  %v724 = vunpack.c.l.b16 %v688
  %v725 = vunpack.c.l.b16 %v689
  %v726 = vunpack.c.l.b16 %v690
  %v727 = vunpack.c.l.b16 %v691
  %v728 = vunpack.c.l.b16 %v692
  %v729 = vunpack.c.l.b16 %v693
  %v730 = vunpack.c.l.b16 %v694
  %v731 = vpack.c.b16 %v716, %v715
  %v732 = vpack.c.b16 %v718, %v717
  %v733 = vpack.c.b16 %v720, %v719
  %v734 = vpack.c.b16 %v722, %v721
  %v735 = vpack.c.b16 %v724, %v723
  %v736 = vpack.c.b16 %v726, %v725
  %v737 = vpack.c.b16 %v728, %v727
  %v738 = vpack.c.b16 %v730, %v729
  %747 = vmatpush.bf16.msra.mxu0 %v738
  %748 = vmatpush.bf16.msra.mxu0 %v737
  %749 = vmatpush.bf16.msra.mxu0 %v736
  %750 = vmatpush.bf16.msra.mxu0 %v735
  %751 = vmatpush.bf16.msra.mxu0 %v734
  %752 = vmatpush.bf16.msra.mxu0 %v733
  %753 = vmatpush.bf16.msra.mxu0 %v732
  %754 = vmatpush.bf16.msra.mxu0 %v731
  %755 = vmatmul.bf16.gmra.mxu0 %v678
  %v756 = vpop.f32.mrf.mxu0
  %v757 = vadd.f32 %v697, %v756
  %v758 = vpop.f32.mrf.mxu0
  %759 = vdwg.mxu0
  %v760 = vld [vmem:[%s5] sm:$0xff]
  %v761 = vld [vmem:[%s5 + $0x8] sm:$0xff]
  %v762 = vld [vmem:[%s5 + $0x10] sm:$0xff]
  %v763 = vld [vmem:[%s5 + $0x18] sm:$0xff]
  %v764 = vld [vmem:[%s5 + $0x20] sm:$0xff]
  %v765 = vld [vmem:[%s5 + $0x28] sm:$0xff]
  %v766 = vld [vmem:[%s5 + $0x30] sm:$0xff]
  %v767 = vld [vmem:[%s5 + $0x38] sm:$0xff]
  %v768 = vld [vmem:[%s5 + $0x40] sm:$0xff]
  %v769 = vld [vmem:[%s5 + $0x48] sm:$0xff]
  %v770 = vld [vmem:[%s5 + $0x50] sm:$0xff]
  %v771 = vld [vmem:[%s5 + $0x58] sm:$0xff]
  %v772 = vld [vmem:[%s5 + $0x60] sm:$0xff]
  %v773 = vld [vmem:[%s5 + $0x68] sm:$0xff]
  %v774 = vld [vmem:[%s5 + $0x70] sm:$0xff]
  %v775 = vld [vmem:[%s5 + $0x78] sm:$0xff]
  %776 = vmatpush.msra.mxu0 %v775
  %777 = vmatpush.msra.mxu0 %v774
  %778 = vmatpush.msra.mxu0 %v773
  %779 = vmatpush.msra.mxu0 %v772
  %780 = vmatpush.msra.mxu0 %v771
  %781 = vmatpush.msra.mxu0 %v770
  %782 = vmatpush.msra.mxu0 %v769
  %783 = vmatpush.msra.mxu0 %v768
  %784 = vmatpush.msra.mxu0 %v767
  %785 = vmatpush.msra.mxu0 %v766
  %786 = vmatpush.msra.mxu0 %v765
  %787 = vmatpush.msra.mxu0 %v764
  %788 = vmatpush.msra.mxu0 %v763
  %789 = vmatpush.msra.mxu0 %v762
  %790 = vmatpush.msra.mxu0 %v761
  %791 = vmatpush.msra.mxu0 %v760
  %792 = vmatmul.f32.gmra.mxu0 %v757
  %v793 = vpop.f32.mrf.mxu0
  %v794 = vadd.f32 0.0, %v793
  %795 = vdwg.mxu0
  %v796 = vmul.f32 %v757, %v757
  %vm797 = vcmask 1041408
  %v798 = vsel %vm797, %v796, 0.0
  %799 = vadd.xlane.f32.xlu0 %v798
  %v800 = vpop.xlane.xlu0 %799
  %v801 = vld [vmem:[%s6] sm:$0x1]
  %v803 = vperm.slane %v801, 0
  %v805 = vadd.f32 %v800, %v803
  %v806 = vmul.f32 %v794, 2.0
  %v807 = vsub.f32 %v805, %v806
  %v808 = vmax.f32 %v807, 0.0
  %v809 = vrsqrt.pop %v808
  %v810 = vmul.f32 %v809, %v808
  %v811 = vmul.f32 %v810, %v809
  %v812 = vmul.f32 0.5, %v811
  %v813 = vsub.f32 1.5, %v812
  %v814 = vmul.f32 %v809, %v813
  %v815 = vmul.f32 %v808, %v814
  %vm816 = vcmp.eq.f32.partialorder %v808, inf
  %v817 = vsel %vm816, %v808, %v815
  %vm818 = vcmp.eq.f32.partialorder %v808, 0.0
  %v819 = vand.u32 %v808, 2147483648
  %v820 = vsel %vm818, %v819, %v817
  %v821 = vsub.f32 0.0, %v820
  %v822 = vlaneseq
  %v823 = vand.u32 %v822, 127
  %vm824 = vcmp.lt.s32.totalorder %v823, 32
  %v825 = vsel %vm824, %v757, %v821
  %826 = vst [vmem:[%s7] sm:$0x3] %v825
  // Predicated region
  $region30: #{protonet_forward.1} parent=0 // pred_check
    _
  $region31: #{protonet_forward.1} parent=0 // pred_check_branch
    %828 = sbr.rel (0) target = $region33
  $region32: #{protonet_forward.1} parent=0 // pred_region
    _
  $region33: #{protonet_forward.1} parent=0 // pred_fallthru
    _
  // Predicated region
  $region34: #{protonet_forward.1} parent=0 // pred_check
    _
  $region35: #{protonet_forward.1} parent=0 // pred_check_branch
    %830 = sbr.rel (0) target = $region37
  $region36: #{protonet_forward.1} parent=0 // pred_region
    _
  $region37: #{protonet_forward.1} parent=0 // pred_fallthru
    _

</llo_original>
